<compile_context>
chip_gen: v6e
topology: v6e:2x2x1
jax: 0.10.0
libtpu: 0.0.40
codegen_flags: <defaults>
</compile_context>

<pallas_src>
import jax
import jax.numpy as jnp
import numpy as np
from jax.experimental import pallas as pl
from jax.experimental.pallas import tpu as pltpu


def _ultragcn_kernel(u_ref, v_ref, o_ref):
    # u_ref / v_ref: (TB, D) gathered embedding tiles
    #                (batch on sublanes, embedding dim on lanes).
    # o_ref:         (TB, 1) per-row score tile.
    u = u_ref[...].astype(jnp.float32)   # keep: bf16 streaming stays correct on v5e
    v = v_ref[...].astype(jnp.float32)
    prod = u * v                                       # VPU, full tile
    score = jnp.sum(prod, axis=-1, keepdims=True)      # lane reduce (XLU) -> (TB, 1)
    o_ref[...] = jax.nn.sigmoid(score)                 # EUP


def _round_up(x, m):
    return ((x + m - 1) // m) * m


def ultragcn_forward(user_embeds, item_embeds, data, *,
                     stream_dtype=jnp.bfloat16,
                     block_vmem_budget_bytes=16 * 1024 * 1024,
                     max_tile_b=8192):
    """Pallas implementation of UltraGCN.forward(data)."""
    users = data[:, 0].astype(jnp.int32)
    items = data[:, 1].astype(jnp.int32)
    B = int(data.shape[0])
    D = int(user_embeds.shape[1])

    # bf16 streaming: halves HBM traffic for the gather and the kernel stream.
    ue = user_embeds.astype(stream_dtype)
    ie = item_embeds.astype(stream_dtype)
    in_itemsize = jnp.dtype(stream_dtype).itemsize

    # --- Batch tile sizing (generation-aware: must fit v7x's 64 MiB VMEM) ---
    # VMEM bytes per batch row, counting lane padding and double buffering:
    #   inputs : 2 arrays x 2 buffers x round_up(D, 128) lanes x itemsize
    #   output : 2 buffers x 128 lanes x 4 bytes (f32 (TB, 1) score block)
    d_lane = _round_up(D, 128)
    bytes_per_row = 2 * 2 * d_lane * in_itemsize + 2 * 128 * 4
    tb_cap = max(128, (block_vmem_budget_bytes // bytes_per_row) // 128 * 128)

    Bp_min = _round_up(B, 128)
    TB = min(tb_cap, max_tile_b, Bp_min)
    # v7x megacore: if the whole batch would be one tile, split into two tiles
    # so both TensorCores get work (harmless on single-core v5e/v6e).
    if TB >= Bp_min and Bp_min > 128:
        TB = _round_up(pl.cdiv(Bp_min, 2), 128)
    Bp = _round_up(B, TB)
    num_tiles = Bp // TB

    # --- Gather (padding fused into the gather via padded indices) ----------
    # Pad the tiny int32 index vectors instead of the gathered activations, so
    # the (Bp, D) arrays come straight out of one gather pass (no extra pad or
    # transpose pass over the activations).  Padded rows reuse row 0 and are
    # sliced off at the end.
    users_p = jnp.pad(users, (0, Bp - B))
    items_p = jnp.pad(items, (0, Bp - B))
    u_g = jnp.take(ue, users_p, axis=0)                # (Bp, D) stream_dtype
    i_g = jnp.take(ie, items_p, axis=0)                # (Bp, D) stream_dtype

    cost = pl.CostEstimate(
        flops=2 * Bp * D,
        transcendentals=Bp,
        bytes_accessed=2 * Bp * D * in_itemsize + 2 * Bp * 4 + Bp * 4,
    )

    out = pl.pallas_call(
        _ultragcn_kernel,
        out_shape=jax.ShapeDtypeStruct((Bp, 1), jnp.float32),
        grid=(num_tiles,),
        in_specs=[
            pl.BlockSpec((TB, D), lambda i: (i, 0)),
            pl.BlockSpec((TB, D), lambda i: (i, 0)),
        ],
        out_specs=pl.BlockSpec((TB, 1), lambda i: (i, 0)),
        compiler_params=pltpu.CompilerParams(
            dimension_semantics=("parallel",),
            vmem_limit_bytes=32 * 1024 * 1024,
        ),
        cost_estimate=cost,
    )(u_g, i_g)

    return out[:B, 0]                                  # (B,) like the PyTorch module


def _xavier_normal(key, shape):
    # torch.nn.init.xavier_normal_ on a (num_embeddings, embedding_dim) table:
    # fan_in = embedding_dim, fan_out = num_embeddings, gain = 1.
    fan_out, fan_in = shape
    std = (2.0 / (fan_in + fan_out)) ** 0.5
    return std * jax.random.normal(key, shape, dtype=jnp.float32)


if __name__ == "__main__":
    user_num, item_num, embedding_dim, batch = 32, 48, 32, 8

    key = jax.random.PRNGKey(0)
    k_u, k_i, k_users, k_items = jax.random.split(key, 4)

    # Deterministic synthetic parameters (module __init__ shapes).
    user_embeds = _xavier_normal(k_u, (user_num, embedding_dim))
    item_embeds = _xavier_normal(k_i, (item_num, embedding_dim))

    users = jax.random.randint(k_users, (batch,), 0, user_num, dtype=jnp.int32)
    items = jax.random.randint(k_items, (batch,), 0, item_num, dtype=jnp.int32)
    data = jnp.stack([users, items], axis=1)           # (batch, 2)

    out = jax.block_until_ready(ultragcn_forward(user_embeds, item_embeds, data))

    # Pure-JAX reference: identical bf16 input rounding as the streaming path,
    # f32 math, so the tolerance stays tight.
    ue = user_embeds.astype(jnp.bfloat16).astype(jnp.float32)
    ie = item_embeds.astype(jnp.bfloat16).astype(jnp.float32)
    ref = jax.nn.sigmoid(jnp.sum(ue[users] * ie[items], axis=-1))

    assert out.shape == (batch,) and out.dtype == jnp.float32
    np.testing.assert_allclose(np.asarray(out), np.asarray(ref),
                               rtol=1e-5, atol=1e-5)
    print("KERNEL_OK")
</pallas_src>

<mosaic_0001>
module attributes {stable_mosaic.version = 11 : i64} {
  func.func @_ultragcn_kernel(%arg0: i32, %arg1: memref<128x32xbf16, #tpu.memory_space<vmem>>, %arg2: memref<128x32xbf16, #tpu.memory_space<vmem>>, %arg3: memref<128x1xf32, #tpu.memory_space<vmem>>) attributes {dimension_semantics = [#tpu.dimension_semantics<parallel>], iteration_bounds = array<i64: 1>, scalar_prefetch = 0 : i64, scratch_operands = 0 : i64, tpu.core_type = #tpu.core_type<tc>, window_params = [{transform_indices = @transform_0, window_bounds = array<i64: 128, 32>}, {transform_indices = @transform_1, window_bounds = array<i64: 128, 32>}, {transform_indices = @transform_2, window_bounds = array<i64: 128, 1>}]} {
    %c0 = arith.constant 0 : index
    %c0_0 = arith.constant 0 : index
    %0 = vector.load %arg1[%c0, %c0_0] : memref<128x32xbf16, #tpu.memory_space<vmem>>, vector<128x32xbf16>
    %1 = arith.extf %0 : vector<128x32xbf16> to vector<128x32xf32>
    %c0_1 = arith.constant 0 : index
    %c0_2 = arith.constant 0 : index
    %2 = vector.load %arg2[%c0_1, %c0_2] : memref<128x32xbf16, #tpu.memory_space<vmem>>, vector<128x32xbf16>
    %3 = arith.extf %2 : vector<128x32xbf16> to vector<128x32xf32>
    %4 = arith.mulf %1, %3 : vector<128x32xf32>
    %cst = arith.constant dense<0.000000e+00> : vector<128xf32>
    %5 = vector.multi_reduction <add>, %4, %cst [1] : vector<128x32xf32> to vector<128xf32>
    %6 = vector.shape_cast %5 : vector<128xf32> to vector<128x1xf32>
    %7 = arith.negf %6 : vector<128x1xf32>
    %8 = math.exp %7 : vector<128x1xf32>
    %cst_3 = arith.constant 1.000000e+00 : f32
    %9 = vector.broadcast %cst_3 : f32 to vector<128x1xf32>
    %10 = arith.addf %9, %8 : vector<128x1xf32>
    %11 = arith.divf %9, %10 : vector<128x1xf32>
    %c0_4 = arith.constant 0 : index
    %c0_5 = arith.constant 0 : index
    %12 = vector.load %arg3[%c0_4, %c0_5] : memref<128x1xf32, #tpu.memory_space<vmem>>, vector<128x1xf32>
    tpu.vector_store %arg3[%c0_4, %c0_5], %11 {strides = array<i32>} : memref<128x1xf32, #tpu.memory_space<vmem>>, vector<128x1xf32>,
    return
  }
  func.func @transform_0(%arg0: i32) -> (i32, i32) {
    %c0_i32 = arith.constant 0 : i32
    %c0_i32_0 = arith.constant 0 : i32
    return %arg0, %c0_i32 : i32, i32
  }
  func.func @transform_1(%arg0: i32) -> (i32, i32) {
    %c0_i32 = arith.constant 0 : i32
    %c0_i32_0 = arith.constant 0 : i32
    return %arg0, %c0_i32 : i32, i32
  }
  func.func @transform_2(%arg0: i32) -> (i32, i32) {
    %c0_i32 = arith.constant 0 : i32
    %c0_i32_0 = arith.constant 0 : i32
    return %arg0, %c0_i32 : i32, i32
  }
}

</mosaic_0001>

<llo_original>
// kernel: tpu_custom_call.1
$region0: #{tpu_custom_call.1}
  #allocation0 [shape = 'u32[]', space=smem, size = 0x4, offset = 0x4, fixed_abs, tag = 'smem constant byte address 0x4 - core index']
  #allocation1 [shape = 'u32[144,128]{1,0:T(1,128)}', space=vmem, size = 0x12000, scoped, tag = 'internal scratch']
  %s0 = inlined_call_operand.vmem [shape: bf16[128,32], index: 0, kind: input, shape index: {}]
  %s1 = inlined_call_operand.vmem [shape: bf16[128,32], index: 1, kind: input, shape index: {}]
  %s2 = inlined_call_operand.vmem [shape: f32[128,1], index: 2, kind: output, shape index: {}]
  %s3 = sld [smem:[#allocation0]]
  $region18: #{tpu_custom_call.1} parent=0
    _
  %s5 = ssub.s32 1, %s3
  %s6 = scalar_select 0, %s5, %s3
  // Predicated region
  $region2: #{tpu_custom_call.1} parent=0 // pred_check
    _
  $region3: #{tpu_custom_call.1} parent=0 // pred_check_branch
    %8 = sbr.rel (0) target = $region5
  $region4: #{tpu_custom_call.1} parent=0 // pred_region
    _
  $region5: #{tpu_custom_call.1} parent=0 // pred_fallthru
    _
  // Predicated region
  $region6: #{tpu_custom_call.1} parent=0 // pred_check
    _
  $region7: #{tpu_custom_call.1} parent=0 // pred_check_branch
    %10 = sbr.rel (0) target = $region9
  $region8: #{tpu_custom_call.1} parent=0 // pred_region
    _
  $region9: #{tpu_custom_call.1} parent=0 // pred_fallthru
    _
  %v11 = vld [vmem:[%s0] sm:$0xf]
  %v12 = vld [vmem:[%s0 + $0x4] sm:$0xf]
  %v13 = vld [vmem:[%s0 + $0x8] sm:$0xf]
  %v14 = vld [vmem:[%s0 + $0xc] sm:$0xf]
  %v15 = vld [vmem:[%s0 + $0x10] sm:$0xf]
  %v16 = vld [vmem:[%s0 + $0x14] sm:$0xf]
  %v17 = vld [vmem:[%s0 + $0x18] sm:$0xf]
  %v18 = vld [vmem:[%s0 + $0x1c] sm:$0xf]
  %v19 = vld [vmem:[%s0 + $0x20] sm:$0xf]
  %v20 = vld [vmem:[%s0 + $0x24] sm:$0xf]
  %v21 = vld [vmem:[%s0 + $0x28] sm:$0xf]
  %v22 = vld [vmem:[%s0 + $0x2c] sm:$0xf]
  %v23 = vld [vmem:[%s0 + $0x30] sm:$0xf]
  %v24 = vld [vmem:[%s0 + $0x34] sm:$0xf]
  %v25 = vld [vmem:[%s0 + $0x38] sm:$0xf]
  %v26 = vld [vmem:[%s0 + $0x3c] sm:$0xf]
  %v27 = vunpack.c.l.bf16 %v11
  %v28 = vunpack.c.l.bf16 %v12
  %v29 = vunpack.c.l.bf16 %v13
  %v30 = vunpack.c.l.bf16 %v14
  %v31 = vunpack.c.l.bf16 %v15
  %v32 = vunpack.c.l.bf16 %v16
  %v33 = vunpack.c.l.bf16 %v17
  %v34 = vunpack.c.l.bf16 %v18
  %v35 = vunpack.c.l.bf16 %v19
  %v36 = vunpack.c.l.bf16 %v20
  %v37 = vunpack.c.l.bf16 %v21
  %v38 = vunpack.c.l.bf16 %v22
  %v39 = vunpack.c.l.bf16 %v23
  %v40 = vunpack.c.l.bf16 %v24
  %v41 = vunpack.c.l.bf16 %v25
  %v42 = vunpack.c.l.bf16 %v26
  %v43 = vld [vmem:[%s1] sm:$0xf]
  %v44 = vld [vmem:[%s1 + $0x4] sm:$0xf]
  %v45 = vld [vmem:[%s1 + $0x8] sm:$0xf]
  %v46 = vld [vmem:[%s1 + $0xc] sm:$0xf]
  %v47 = vld [vmem:[%s1 + $0x10] sm:$0xf]
  %v48 = vld [vmem:[%s1 + $0x14] sm:$0xf]
  %v49 = vld [vmem:[%s1 + $0x18] sm:$0xf]
  %v50 = vld [vmem:[%s1 + $0x1c] sm:$0xf]
  %v51 = vld [vmem:[%s1 + $0x20] sm:$0xf]
  %v52 = vld [vmem:[%s1 + $0x24] sm:$0xf]
  %v53 = vld [vmem:[%s1 + $0x28] sm:$0xf]
  %v54 = vld [vmem:[%s1 + $0x2c] sm:$0xf]
  %v55 = vld [vmem:[%s1 + $0x30] sm:$0xf]
  %v56 = vld [vmem:[%s1 + $0x34] sm:$0xf]
  %v57 = vld [vmem:[%s1 + $0x38] sm:$0xf]
  %v58 = vld [vmem:[%s1 + $0x3c] sm:$0xf]
  %v59 = vunpack.c.l.bf16 %v43
  %v60 = vunpack.c.l.bf16 %v44
  %v61 = vunpack.c.l.bf16 %v45
  %v62 = vunpack.c.l.bf16 %v46
  %v63 = vunpack.c.l.bf16 %v47
  %v64 = vunpack.c.l.bf16 %v48
  %v65 = vunpack.c.l.bf16 %v49
  %v66 = vunpack.c.l.bf16 %v50
  %v67 = vunpack.c.l.bf16 %v51
  %v68 = vunpack.c.l.bf16 %v52
  %v69 = vunpack.c.l.bf16 %v53
  %v70 = vunpack.c.l.bf16 %v54
  %v71 = vunpack.c.l.bf16 %v55
  %v72 = vunpack.c.l.bf16 %v56
  %v73 = vunpack.c.l.bf16 %v57
  %v74 = vunpack.c.l.bf16 %v58
  %v75 = vmul.f32 %v27, %v59
  %v76 = vmul.f32 %v28, %v60
  %v77 = vmul.f32 %v29, %v61
  %v78 = vmul.f32 %v30, %v62
  %v79 = vmul.f32 %v31, %v63
  %v80 = vmul.f32 %v32, %v64
  %v81 = vmul.f32 %v33, %v65
  %v82 = vmul.f32 %v34, %v66
  %v83 = vmul.f32 %v35, %v67
  %v84 = vmul.f32 %v36, %v68
  %v85 = vmul.f32 %v37, %v69
  %v86 = vmul.f32 %v38, %v70
  %v87 = vmul.f32 %v39, %v71
  %v88 = vmul.f32 %v40, %v72
  %v89 = vmul.f32 %v41, %v73
  %v90 = vmul.f32 %v42, %v74
  %vm91 = vcmask 261120
  %v92 = vsel %vm91, %v75, 0.0
  %93 = vadd.xlane.f32.xlu0 %v92
  %v94 = vpop.xlane.xlu0 %93
  %v95 = vsel %vm91, %v76, 0.0
  %96 = vadd.xlane.f32.xlu0 %v95
  %v97 = vpop.xlane.xlu0 %96
  %v98 = vsel %vm91, %v77, 0.0
  %99 = vadd.xlane.f32.xlu0 %v98
  %v100 = vpop.xlane.xlu0 %99
  %v101 = vsel %vm91, %v78, 0.0
  %102 = vadd.xlane.f32.xlu0 %v101
  %v103 = vpop.xlane.xlu0 %102
  %v104 = vsel %vm91, %v79, 0.0
  %105 = vadd.xlane.f32.xlu0 %v104
  %v106 = vpop.xlane.xlu0 %105
  %v107 = vsel %vm91, %v80, 0.0
  %108 = vadd.xlane.f32.xlu0 %v107
  %v109 = vpop.xlane.xlu0 %108
  %v110 = vsel %vm91, %v81, 0.0
  %111 = vadd.xlane.f32.xlu0 %v110
  %v112 = vpop.xlane.xlu0 %111
  %v113 = vsel %vm91, %v82, 0.0
  %114 = vadd.xlane.f32.xlu0 %v113
  %v115 = vpop.xlane.xlu0 %114
  %v116 = vsel %vm91, %v83, 0.0
  %117 = vadd.xlane.f32.xlu0 %v116
  %v118 = vpop.xlane.xlu0 %117
  %v119 = vsel %vm91, %v84, 0.0
  %120 = vadd.xlane.f32.xlu0 %v119
  %v121 = vpop.xlane.xlu0 %120
  %v122 = vsel %vm91, %v85, 0.0
  %123 = vadd.xlane.f32.xlu0 %v122
  %v124 = vpop.xlane.xlu0 %123
  %v125 = vsel %vm91, %v86, 0.0
  %126 = vadd.xlane.f32.xlu0 %v125
  %v127 = vpop.xlane.xlu0 %126
  %v128 = vsel %vm91, %v87, 0.0
  %129 = vadd.xlane.f32.xlu0 %v128
  %v130 = vpop.xlane.xlu0 %129
  %v131 = vsel %vm91, %v88, 0.0
  %132 = vadd.xlane.f32.xlu0 %v131
  %v133 = vpop.xlane.xlu0 %132
  %v134 = vsel %vm91, %v89, 0.0
  %135 = vadd.xlane.f32.xlu0 %v134
  %v136 = vpop.xlane.xlu0 %135
  %v137 = vsel %vm91, %v90, 0.0
  %138 = vadd.xlane.f32.xlu0 %v137
  %v139 = vpop.xlane.xlu0 %138
  %v140 = vxor.u32 %v94, 2147483648
  %v141 = vxor.u32 %v97, 2147483648
  %v142 = vxor.u32 %v100, 2147483648
  %v143 = vxor.u32 %v103, 2147483648
  %v144 = vxor.u32 %v106, 2147483648
  %v145 = vxor.u32 %v109, 2147483648
  %v146 = vxor.u32 %v112, 2147483648
  %v147 = vxor.u32 %v115, 2147483648
  %v148 = vxor.u32 %v118, 2147483648
  %v149 = vxor.u32 %v121, 2147483648
  %v150 = vxor.u32 %v124, 2147483648
  %v151 = vxor.u32 %v127, 2147483648
  %v152 = vxor.u32 %v130, 2147483648
  %v153 = vxor.u32 %v133, 2147483648
  %v154 = vxor.u32 %v136, 2147483648
  %v155 = vxor.u32 %v139, 2147483648
  %v156 = vmul.f32 %v140, 1.442695
  %v157 = vpow.pop %v156
  %v158 = vmul.f32 %v141, 1.442695
  %v159 = vpow.pop %v158
  %v160 = vmul.f32 %v142, 1.442695
  %v161 = vpow.pop %v160
  %v162 = vmul.f32 %v143, 1.442695
  %v163 = vpow.pop %v162
  %v164 = vmul.f32 %v144, 1.442695
  %v165 = vpow.pop %v164
  %v166 = vmul.f32 %v145, 1.442695
  %v167 = vpow.pop %v166
  %v168 = vmul.f32 %v146, 1.442695
  %v169 = vpow.pop %v168
  %v170 = vmul.f32 %v147, 1.442695
  %v171 = vpow.pop %v170
  %v172 = vmul.f32 %v148, 1.442695
  %v173 = vpow.pop %v172
  %v174 = vmul.f32 %v149, 1.442695
  %v175 = vpow.pop %v174
  %v176 = vmul.f32 %v150, 1.442695
  %v177 = vpow.pop %v176
  %v178 = vmul.f32 %v151, 1.442695
  %v179 = vpow.pop %v178
  %v180 = vmul.f32 %v152, 1.442695
  %v181 = vpow.pop %v180
  %v182 = vmul.f32 %v153, 1.442695
  %v183 = vpow.pop %v182
  %v184 = vmul.f32 %v154, 1.442695
  %v185 = vpow.pop %v184
  %v186 = vmul.f32 %v155, 1.442695
  %v187 = vpow.pop %v186
  %v188 = vadd.f32 %v157, 1.0
  %v189 = vadd.f32 %v159, 1.0
  %v190 = vadd.f32 %v161, 1.0
  %v191 = vadd.f32 %v163, 1.0
  %v192 = vadd.f32 %v165, 1.0
  %v193 = vadd.f32 %v167, 1.0
  %v194 = vadd.f32 %v169, 1.0
  %v195 = vadd.f32 %v171, 1.0
  %v196 = vadd.f32 %v173, 1.0
  %v197 = vadd.f32 %v175, 1.0
  %v198 = vadd.f32 %v177, 1.0
  %v199 = vadd.f32 %v179, 1.0
  %v200 = vadd.f32 %v181, 1.0
  %v201 = vadd.f32 %v183, 1.0
  %v202 = vadd.f32 %v185, 1.0
  %v203 = vadd.f32 %v187, 1.0
  %v204 = vrcp.pop %v188
  %v205 = vmul.f32 1.0, %v204
  %v206 = vrcp.pop %v189
  %v207 = vmul.f32 1.0, %v206
  %v208 = vrcp.pop %v190
  %v209 = vmul.f32 1.0, %v208
  %v210 = vrcp.pop %v191
  %v211 = vmul.f32 1.0, %v210
  %v212 = vrcp.pop %v192
  %v213 = vmul.f32 1.0, %v212
  %v214 = vrcp.pop %v193
  %v215 = vmul.f32 1.0, %v214
  %v216 = vrcp.pop %v194
  %v217 = vmul.f32 1.0, %v216
  %v218 = vrcp.pop %v195
  %v219 = vmul.f32 1.0, %v218
  %v220 = vrcp.pop %v196
  %v221 = vmul.f32 1.0, %v220
  %v222 = vrcp.pop %v197
  %v223 = vmul.f32 1.0, %v222
  %v224 = vrcp.pop %v198
  %v225 = vmul.f32 1.0, %v224
  %v226 = vrcp.pop %v199
  %v227 = vmul.f32 1.0, %v226
  %v228 = vrcp.pop %v200
  %v229 = vmul.f32 1.0, %v228
  %v230 = vrcp.pop %v201
  %v231 = vmul.f32 1.0, %v230
  %v232 = vrcp.pop %v202
  %v233 = vmul.f32 1.0, %v232
  %v234 = vrcp.pop %v203
  %v235 = vmul.f32 1.0, %v234
  %vm236 = vcmask 7168
  %237 = vst.msk [vmem:[%s2] sm:$0xff] %vm236, %v205
  %238 = vst.msk [vmem:[%s2 + $0x8] sm:$0xff] %vm236, %v207
  %239 = vst.msk [vmem:[%s2 + $0x10] sm:$0xff] %vm236, %v209
  %240 = vst.msk [vmem:[%s2 + $0x18] sm:$0xff] %vm236, %v211
  %241 = vst.msk [vmem:[%s2 + $0x20] sm:$0xff] %vm236, %v213
  %242 = vst.msk [vmem:[%s2 + $0x28] sm:$0xff] %vm236, %v215
  %243 = vst.msk [vmem:[%s2 + $0x30] sm:$0xff] %vm236, %v217
  %244 = vst.msk [vmem:[%s2 + $0x38] sm:$0xff] %vm236, %v219
  %245 = vst.msk [vmem:[%s2 + $0x40] sm:$0xff] %vm236, %v221
  %246 = vst.msk [vmem:[%s2 + $0x48] sm:$0xff] %vm236, %v223
  %247 = vst.msk [vmem:[%s2 + $0x50] sm:$0xff] %vm236, %v225
  %248 = vst.msk [vmem:[%s2 + $0x58] sm:$0xff] %vm236, %v227
  %249 = vst.msk [vmem:[%s2 + $0x60] sm:$0xff] %vm236, %v229
  %250 = vst.msk [vmem:[%s2 + $0x68] sm:$0xff] %vm236, %v231
  %251 = vst.msk [vmem:[%s2 + $0x70] sm:$0xff] %vm236, %v233
  %252 = vst.msk [vmem:[%s2 + $0x78] sm:$0xff] %vm236, %v235
  // Predicated region
  $region10: #{tpu_custom_call.1} parent=0 // pred_check
    _
  $region11: #{tpu_custom_call.1} parent=0 // pred_check_branch
    %254 = sbr.rel (0) target = $region13
  $region12: #{tpu_custom_call.1} parent=0 // pred_region
    _
  $region13: #{tpu_custom_call.1} parent=0 // pred_fallthru
    _
  // Predicated region
  $region14: #{tpu_custom_call.1} parent=0 // pred_check
    _
  $region15: #{tpu_custom_call.1} parent=0 // pred_check_branch
    %256 = sbr.rel (0) target = $region17
  $region16: #{tpu_custom_call.1} parent=0 // pred_region
    _
  $region17: #{tpu_custom_call.1} parent=0 // pred_fallthru
    _

</llo_original>
